<compile_context>
chip_gen: v6e
topology: v6e:2x2x1
jax: 0.10.0
libtpu: 0.0.40
codegen_flags: <defaults>
</compile_context>

<pallas_src>
import functools
import numpy as np
import jax
import jax.numpy as jnp
from jax import lax
from jax.experimental import pallas as pl
from jax.experimental.pallas import tpu as pltpu

LANES = 128
TARGET_BLOCK_BYTES = 4 * 1024 * 1024   # native-dtype bytes streamed per grid step
VMEM_LIMIT_BYTES = 48 * 1024 * 1024    # 2x input buffers + widened f32 temporaries


def _cdiv(a, b):
    return (a + b - 1) // b


@functools.lru_cache(maxsize=None)
def _num_tensorcores_per_chip():
    """TensorCores addressable by one pallas_call: 2 on v7x-family, else 1."""
    try:
        kind = jax.devices()[0].device_kind.lower()
    except Exception:
        return 1
    if "v7" not in kind and "7x" not in kind:
        return 1                                  # v5e / v6e: single TensorCore
    # TODO(synk): pltpu.TpuInfo field names for the per-chip TensorCore count are
    # not stable across JAX versions; fall back to 2 for v7x-family chips.
    try:
        info = pltpu.get_tpu_info()
        for attr in ("num_tensorcores", "tensorcores_per_chip", "num_cores"):
            n = getattr(info, attr, None)
            if n is not None:
                return max(1, int(n))
    except Exception:
        pass
    return 2


def _ual_partial_kernel(x_ref, o_ref, *, rows_total, tile_rows, blocks_per_core,
                        multi_core, need_guard):
    """Accumulate per-lane column sums of loss_map = 1 - tanh(x/2)^2."""
    if multi_core:
        step = pl.program_id(1)
        gblk = pl.program_id(0) * blocks_per_core + step
    else:
        step = pl.program_id(0)
        gblk = step

    @pl.when(step == 0)
    def _():
        o_ref[...] = jnp.zeros_like(o_ref)

    def _loss_map():
        x = x_ref[...].astype(jnp.float32)   # widen in-register; DMA stays native
        t = jnp.tanh(0.5 * x)                # == 2*sigmoid(x) - 1  (one EUP op)
        return 1.0 - t * t

    if not need_guard:
        # Grid exactly tiles the rows: no masks, no predicates (fast path).
        o_ref[...] += jnp.sum(_loss_map(), axis=0, keepdims=True)
    else:
        row0 = gblk * tile_rows
        fully_valid = row0 + tile_rows <= rows_total
        straddles = jnp.logical_and(row0 < rows_total,
                                    jnp.logical_not(fully_valid))

        @pl.when(fully_valid)
        def _():
            o_ref[...] += jnp.sum(_loss_map(), axis=0, keepdims=True)

        # Only the single block straddling rows_total pays for the iota+mask;
        # fully out-of-range (duplicate) blocks skip the compute entirely.
        @pl.when(straddles)
        def _():
            lm = _loss_map()
            ridx = lax.broadcasted_iota(jnp.int32, lm.shape, 0) + row0
            o_ref[...] += jnp.sum(jnp.where(ridx < rows_total, lm, 0.0),
                                  axis=0, keepdims=True)


def _ual_loss_map_sum(flat2d):
    """flat2d: (R, 128), any float dtype. Returns f32 sum of the loss map."""
    R = int(flat2d.shape[0])
    itemsize = int(jnp.dtype(flat2d.dtype).itemsize)
    max_rows = max(8, (TARGET_BLOCK_BYTES // (LANES * itemsize)) // 8 * 8)
    tile_rows = max_rows if R > max_rows else R      # full-dim block if small
    nrb = _cdiv(R, tile_rows)                        # row blocks covering the array

    ncores = max(1, min(_num_tensorcores_per_chip(), nrb))
    multi_core = ncores > 1
    bpc = _cdiv(nrb, ncores)                         # blocks per core
    need_guard = (ncores * bpc * tile_rows != R)     # ragged last / duplicate blocks

    kernel = functools.partial(
        _ual_partial_kernel, rows_total=R, tile_rows=tile_rows,
        blocks_per_core=bpc, multi_core=multi_core, need_guard=need_guard)

    cost = pl.CostEstimate(
        flops=4 * R * LANES,
        transcendentals=R * LANES,
        bytes_accessed=R * LANES * itemsize + ncores * LANES * 4)

    if multi_core:
        grid = (ncores, bpc)
        in_specs = [pl.BlockSpec(
            (tile_rows, LANES),
            lambda c, j: (jnp.minimum(c * bpc + j, nrb - 1), 0))]
        out_specs = pl.BlockSpec((None, 1, LANES), lambda c, j: (c, 0, 0))
        out_shape = jax.ShapeDtypeStruct((ncores, 1, LANES), jnp.float32)
        dims = (pltpu.CORE_PARALLEL, pltpu.ARBITRARY)
    else:
        grid = (nrb,)
        in_specs = [pl.BlockSpec((tile_rows, LANES), lambda j: (j, 0))]
        out_specs = pl.BlockSpec((1, LANES), lambda j: (0, 0))
        out_shape = jax.ShapeDtypeStruct((1, LANES), jnp.float32)
        dims = (pltpu.ARBITRARY,)

    partials = pl.pallas_call(
        kernel,
        out_shape=out_shape,
        grid_spec=pltpu.PrefetchScalarGridSpec(
            num_scalar_prefetch=0,
            grid=grid,
            in_specs=in_specs,
            out_specs=out_specs,
        ),
        compiler_params=pltpu.CompilerParams(
            dimension_semantics=dims,
            vmem_limit_bytes=VMEM_LIMIT_BYTES,
        ),
        cost_estimate=cost,
    )(flat2d)
    return jnp.sum(partials)


def get_coef(iter_percentage, method):
    if method == 'linear':
        milestones = (0.3, 0.7)
        coef_range = (0, 1)
        min_point, max_point = (min(milestones), max(milestones))
        min_coef, max_coef = (min(coef_range), max(coef_range))
        if iter_percentage < min_point:
            ual_coef = min_coef
        elif iter_percentage > max_point:
            ual_coef = max_coef
        else:
            ratio = (max_coef - min_coef) / (max_point - min_point)
            ual_coef = ratio * (iter_percentage - min_point)
    elif method == 'cos':
        coef_range = (0, 1)
        min_coef, max_coef = (min(coef_range), max(coef_range))
        normalized_coef = (1 - np.cos(iter_percentage * np.pi)) / 2
        ual_coef = normalized_coef * (max_coef - min_coef) + min_coef
    else:
        ual_coef = 1.0
    return float(ual_coef)


@jax.jit
def _ual_core(pred, coef):
    n_elem = int(np.prod(pred.shape))
    flat = pred.reshape(-1)                       # copy-free flatten, native dtype
    n_main = (n_elem // LANES) * LANES

    if n_main == 0:
        t = jnp.tanh(0.5 * flat.astype(jnp.float32))
        total = jnp.sum(1.0 - t * t)
    else:
        if n_main == n_elem:
            main2d = flat.reshape(-1, LANES)      # copy-free aligned fast path
        else:
            # TODO(synk): a fully copy-free ragged prefix would need a 1-D /
            # manual-DMA kernel; this prefix slice (instead of the previous
            # whole-array jnp.pad) only triggers when n_elem % 128 != 0.
            main2d = flat[:n_main].reshape(-1, LANES)
        total = _ual_loss_map_sum(main2d)
        if n_main != n_elem:
            # <128-element ragged tail folded in with plain JAX ops.
            t = jnp.tanh(0.5 * flat[n_main:].astype(jnp.float32))
            total = total + jnp.sum(1.0 - t * t)

    return (total / jnp.float32(n_elem)) * coef.astype(jnp.float32)


def ual_loss(pred, gts, method="cos", iter_percentage=0.0):
    """JAX/Pallas equivalent of UALloss.forward (pred/gts in NCHW)."""
    # Original module resizes gts to pred's spatial size solely to satisfy the
    # shape assert in cal_ual; the resized values are never used numerically,
    # so only the implied constraint is checked (no resize is materialized).
    assert pred.ndim == 4 and gts.ndim == 4, (pred.shape, gts.shape)
    assert pred.shape[:2] == gts.shape[:2], (pred.shape, gts.shape)
    coef = get_coef(float(iter_percentage), method)   # host-side Python schedule
    return _ual_core(pred, jnp.float32(coef))         # coef traced -> no recompile


def _reference(pred, gts, method="cos", iter_percentage=0.0):
    s = jax.nn.sigmoid(pred.astype(jnp.float32))
    lm = 1.0 - jnp.abs(2.0 * s - 1.0) ** 2
    return jnp.mean(lm) * get_coef(float(iter_percentage), method)


if __name__ == "__main__":
    key = jax.random.PRNGKey(0)
    k1, k2, k3 = jax.random.split(key, 3)

    # pred: segmentation logits (NCHW); gts: ground truth at another resolution.
    pred = jax.random.normal(k1, (2, 4, 16, 16), dtype=jnp.float32) * 3.0
    gts = jax.random.uniform(k2, (2, 4, 8, 8), dtype=jnp.float32)

    out = jax.block_until_ready(
        ual_loss(pred, gts, method="cos", iter_percentage=0.5))
    ref = _reference(pred, gts, method="cos", iter_percentage=0.5)
    assert np.allclose(np.asarray(out), np.asarray(ref), rtol=1e-5, atol=1e-6), (
        out, ref)

    # default-argument case (cos schedule at 0 -> coef 0 -> loss 0)
    out0 = jax.block_until_ready(ual_loss(pred, gts))
    assert np.allclose(np.asarray(out0), 0.0), out0

    # bf16 logits + element count not divisible by 128: exercises native-dtype
    # DMA on the aligned prefix and the JAX-side ragged-tail path (no full pad).
    pred_bf = (jax.random.normal(k3, (2, 3, 15, 17), dtype=jnp.float32) * 2.0
               ).astype(jnp.bfloat16)
    gts_bf = jnp.zeros((2, 3, 5, 5), dtype=jnp.float32)
    out_bf = jax.block_until_ready(
        ual_loss(pred_bf, gts_bf, method="linear", iter_percentage=0.6))
    ref_bf = _reference(pred_bf, gts_bf, method="linear", iter_percentage=0.6)
    assert np.allclose(np.asarray(out_bf), np.asarray(ref_bf),
                       rtol=1e-5, atol=1e-6), (out_bf, ref_bf)

    print("KERNEL_OK")
</pallas_src>

<mosaic_0001>
module attributes {stable_mosaic.version = 11 : i64} {
  func.func @_ual_partial_kernel(%arg0: i32, %arg1: memref<16x128xf32, #tpu.memory_space<vmem>>, %arg2: memref<1x128xf32, #tpu.memory_space<vmem>>) attributes {dimension_semantics = [#tpu.dimension_semantics<arbitrary>], iteration_bounds = array<i64: 1>, scalar_prefetch = 0 : i64, scratch_operands = 0 : i64, tpu.core_type = #tpu.core_type<tc>, window_params = [{transform_indices = @transform_0, window_bounds = array<i64: 16, 128>}, {pipeline_mode = #tpu.pipeline_mode<synchronous>, transform_indices = @transform_1, window_bounds = array<i64: 1, 128>}]} {
    %c0_i32 = arith.constant 0 : i32
    %0 = arith.cmpi eq, %arg0, %c0_i32 : i32
    %1 = arith.extui %0 : i1 to i32
    %c0_i32_0 = arith.constant 0 : i32
    %2 = arith.cmpi ne, %1, %c0_i32_0 : i32
    scf.if %2 {
      %cst_8 = arith.constant 0.000000e+00 : f32
      %15 = vector.broadcast %cst_8 : f32 to vector<1x128xf32>
      %c0_9 = arith.constant 0 : index
      %c0_10 = arith.constant 0 : index
      %16 = vector.load %arg2[%c0_9, %c0_10] : memref<1x128xf32, #tpu.memory_space<vmem>>, vector<1x128xf32>
      tpu.vector_store %arg2[%c0_9, %c0_10], %15 {strides = array<i32>} : memref<1x128xf32, #tpu.memory_space<vmem>>, vector<1x128xf32>,
    } else {
    }
    %c0 = arith.constant 0 : index
    %c0_1 = arith.constant 0 : index
    %3 = vector.load %arg2[%c0, %c0_1] : memref<1x128xf32, #tpu.memory_space<vmem>>, vector<1x128xf32>
    %c0_2 = arith.constant 0 : index
    %c0_3 = arith.constant 0 : index
    %4 = vector.load %arg1[%c0_2, %c0_3] : memref<16x128xf32, #tpu.memory_space<vmem>>, vector<16x128xf32>
    %cst = arith.constant 5.000000e-01 : f32
    %5 = vector.broadcast %cst : f32 to vector<16x128xf32>
    %6 = arith.mulf %5, %4 : vector<16x128xf32>
    %7 = math.tanh %6 : vector<16x128xf32>
    %8 = arith.mulf %7, %7 : vector<16x128xf32>
    %cst_4 = arith.constant 1.000000e+00 : f32
    %9 = vector.broadcast %cst_4 : f32 to vector<16x128xf32>
    %10 = arith.subf %9, %8 : vector<16x128xf32>
    %cst_5 = arith.constant dense<0.000000e+00> : vector<128xf32>
    %11 = vector.multi_reduction <add>, %10, %cst_5 [0] : vector<16x128xf32> to vector<128xf32>
    %12 = vector.shape_cast %11 : vector<128xf32> to vector<1x128xf32>
    %13 = arith.addf %3, %12 : vector<1x128xf32>
    %c0_6 = arith.constant 0 : index
    %c0_7 = arith.constant 0 : index
    %14 = vector.load %arg2[%c0_6, %c0_7] : memref<1x128xf32, #tpu.memory_space<vmem>>, vector<1x128xf32>
    tpu.vector_store %arg2[%c0_6, %c0_7], %13 {strides = array<i32>} : memref<1x128xf32, #tpu.memory_space<vmem>>, vector<1x128xf32>,
    return
  }
  func.func @transform_0(%arg0: i32) -> (i32, i32) {
    %c0_i32 = arith.constant 0 : i32
    %c0_i32_0 = arith.constant 0 : i32
    return %arg0, %c0_i32 : i32, i32
  }
  func.func @transform_1(%arg0: i32) -> (i32, i32) {
    %c0_i32 = arith.constant 0 : i32
    %c0_i32_0 = arith.constant 0 : i32
    %c0_i32_1 = arith.constant 0 : i32
    return %c0_i32, %c0_i32_0 : i32, i32
  }
}

</mosaic_0001>

<llo_original>
// kernel: _ual_core.1
$region0: #{_ual_core.1}
  #allocation0 [shape = 'u32[]', space=smem, size = 0x4, offset = 0x4, fixed_abs, tag = 'smem constant byte address 0x4 - core index']
  #allocation1 [shape = 'u32[144,128]{1,0:T(1,128)}', space=vmem, size = 0x12000, scoped, tag = 'internal scratch']
  %s0 = inlined_call_operand.vmem [shape: f32[16,128], index: 0, kind: input, shape index: {}]
  %s1 = inlined_call_operand.vmem [shape: f32[1,128], index: 1, kind: output, shape index: {}]
  %s2 = sld [smem:[#allocation0]]
  $region18: #{_ual_core.1} parent=0
    _
  %s4 = ssub.s32 1, %s2
  %s5 = scalar_select 0, %s4, %s2
  // Predicated region
  $region2: #{_ual_core.1} parent=0 // pred_check
    _
  $region3: #{_ual_core.1} parent=0 // pred_check_branch
    %7 = sbr.rel (0) target = $region5
  $region4: #{_ual_core.1} parent=0 // pred_region
    _
  $region5: #{_ual_core.1} parent=0 // pred_fallthru
    _
  %p8 = scmp.eq.s32.totalorder 0, 0
  // Predicated region
  $region6: #{_ual_core.1} parent=0 // pred_check
    %p9 = pneg %p8
  $region7: #{_ual_core.1} parent=0 // pred_check_branch
    %11 = sbr.rel (%p9) target = $region9
  $region8: #{_ual_core.1} parent=0 // pred_region
    %12 = vst [vmem:[%s1] sm:$0x1] 0.0
  $region9: #{_ual_core.1} parent=0 // pred_fallthru
    _
  %v13 = vld [vmem:[%s1] sm:$0x1]
  %v14 = vld [vmem:[%s0] sm:$0xff]
  %v15 = vld [vmem:[%s0 + $0x8] sm:$0xff]
  %v16 = vmul.f32 %v14, 0.5
  %v17 = vmul.f32 %v15, 0.5
  %v18 = vtanh.pop %v16
  %v19 = vtanh.pop %v17
  %v20 = vmul.f32 %v18, %v18
  %v21 = vmul.f32 %v19, %v19
  %v22 = vsub.f32 1.0, %v20
  %v23 = vsub.f32 1.0, %v21
  %v24 = vadd.f32 %v22, %v23
  %v25 = vrot.slane %v24, 4
  %v26 = vadd.f32 %v24, %v25
  %v27 = vrot.slane %v26, 2
  %v28 = vadd.f32 %v26, %v27
  %v29 = vrot.slane %v28, 1
  %v30 = vadd.f32 %v28, %v29
  %v31 = vadd.f32 %v13, %v30
  %32 = vst [vmem:[%s1] sm:$0x1] %v31
  // Predicated region
  $region10: #{_ual_core.1} parent=0 // pred_check
    _
  $region11: #{_ual_core.1} parent=0 // pred_check_branch
    %34 = sbr.rel (0) target = $region13
  $region12: #{_ual_core.1} parent=0 // pred_region
    _
  $region13: #{_ual_core.1} parent=0 // pred_fallthru
    _
  // Predicated region
  $region14: #{_ual_core.1} parent=0 // pred_check
    _
  $region15: #{_ual_core.1} parent=0 // pred_check_branch
    %36 = sbr.rel (0) target = $region17
  $region16: #{_ual_core.1} parent=0 // pred_region
    _
  $region17: #{_ual_core.1} parent=0 // pred_fallthru
    _

</llo_original>
